<compile_context>
chip_gen: v5e
topology: v5e:2x2
jax: 0.10.0
libtpu: 0.0.40
codegen_flags: <defaults>
</compile_context>

<pallas_src>
import jax
import jax.numpy as jnp
from jax.experimental import pallas as pl
from jax.experimental.pallas import tpu as pltpu


# ----------------------------------------------------------------------------
# Tile-selection helpers (tiles always evenly divide the dim or fall back to
# the full extent, so every BlockSpec obeys the (8, 128) rule).
# ----------------------------------------------------------------------------
def _pick_sub_tile(dim, pref):
    """Tile for a sublane (second-to-last) block dim: multiple of 8 or full."""
    if dim <= pref:
        return dim
    t = (pref // 8) * 8
    while t >= 8:
        if dim % t == 0:
            return t
        t -= 8
    return dim


def _pick_lane_tile(dim, pref):
    """Tile for a lane (last) block dim: multiple of 128 or full extent."""
    if dim <= pref:
        return dim
    t = (pref // 128) * 128
    while t >= 128:
        if dim % t == 0:
            return t
        t -= 128
    return dim


# ----------------------------------------------------------------------------
# Pallas kernels
# ----------------------------------------------------------------------------
def _matmul_acc_kernel(x_ref, w_ref, b_ref, o_ref, acc_ref):
    """o = x @ w + b, accumulated over grid axis 2 (the reduction axis)."""
    @pl.when(pl.program_id(2) == 0)
    def _():
        acc_ref[...] = jnp.zeros_like(acc_ref)

    acc_ref[...] += jnp.dot(x_ref[...], w_ref[...],
                            preferred_element_type=jnp.float32)

    @pl.when(pl.program_id(2) == pl.num_programs(2) - 1)
    def _():
        o_ref[...] = (acc_ref[...] + b_ref[...].astype(jnp.float32)).astype(o_ref.dtype)


def _mha_flash_kernel(q_ref, k_ref, v_ref, o_ref, m_sc, l_sc, acc_sc):
    """Online-softmax attention for one (batch, head, q-tile); kv tiles on axis 3."""
    ki = pl.program_id(3)

    @pl.when(ki == 0)
    def _():
        m_sc[...] = jnp.full_like(m_sc, -jnp.inf)
        l_sc[...] = jnp.zeros_like(l_sc)
        acc_sc[...] = jnp.zeros_like(acc_sc)

    q = q_ref[...]                       # (tq, hd)  -- scale already folded in
    k = k_ref[...]                       # (tk, hd)
    v = v_ref[...]                       # (tk, hd)

    # q @ k^T without materializing a transpose: contract the last axes.
    s = jax.lax.dot_general(q, k, (((1,), (1,)), ((), ())),
                            preferred_element_type=jnp.float32)   # (tq, tk)

    m_prev = m_sc[...]
    m_new = jnp.maximum(m_prev, jnp.max(s, axis=-1, keepdims=True))
    alpha = jnp.exp(m_prev - m_new)
    p = jnp.exp(s - m_new)                                        # un-normalized
    l_sc[...] = alpha * l_sc[...] + jnp.sum(p, axis=-1, keepdims=True)
    acc_sc[...] = alpha * acc_sc[...] + jax.lax.dot_general(
        p.astype(v.dtype), v, (((1,), (0,)), ((), ())),
        preferred_element_type=jnp.float32)
    m_sc[...] = m_new

    @pl.when(ki == pl.num_programs(3) - 1)
    def _():
        # Normalize the (tq, hd) accumulator, not the (tq, tk) score matrix.
        inv_l = pl.reciprocal(l_sc[...], approx=True)
        o_ref[...] = (acc_sc[...] * inv_l).astype(o_ref.dtype)


# ----------------------------------------------------------------------------
# Wrappers
# ----------------------------------------------------------------------------
def pallas_head_projection(x2d, w_heads, b_heads, *, tm_pref=512, tk_pref=512):
    """x2d: (R, Cin) @ w_heads: (H, Cin, hd) + b_heads: (H, 1, hd) -> (H, R, hd)."""
    R, Cin = x2d.shape
    H, _, hd = w_heads.shape
    tm = _pick_sub_tile(R, tm_pref)
    tk = _pick_lane_tile(Cin, tk_pref)
    grid = (R // tm, H, Cin // tk)
    itemsize = x2d.dtype.itemsize
    return pl.pallas_call(
        _matmul_acc_kernel,
        out_shape=jax.ShapeDtypeStruct((H, R, hd), x2d.dtype),
        grid=grid,
        in_specs=[
            pl.BlockSpec((tm, tk), lambda i, h, k: (i, k)),
            pl.BlockSpec((None, tk, hd), lambda i, h, k: (h, k, 0)),
            pl.BlockSpec((None, 1, hd), lambda i, h, k: (h, 0, 0)),
        ],
        out_specs=pl.BlockSpec((None, tm, hd), lambda i, h, k: (h, i, 0)),
        scratch_shapes=[pltpu.VMEM((tm, hd), jnp.float32)],
        compiler_params=pltpu.CompilerParams(
            dimension_semantics=("parallel", "parallel", "arbitrary")),
        cost_estimate=pl.CostEstimate(
            flops=2 * R * Cin * H * hd,
            transcendentals=0,
            bytes_accessed=(R * Cin + H * Cin * hd + H * hd + H * R * hd) * itemsize),
    )(x2d, w_heads, b_heads)


def pallas_out_projection(o_heads, w_heads, b2d, *, tm_pref=256, tn_pref=256):
    """sum_h o_heads[h] @ w_heads[h] + b.  o_heads: (H, R, hd) -> (R, Cout)."""
    H, R, hd = o_heads.shape
    Cout = w_heads.shape[2]
    tm = _pick_sub_tile(R, tm_pref)
    tn = _pick_lane_tile(Cout, tn_pref)
    grid = (R // tm, Cout // tn, H)
    itemsize = o_heads.dtype.itemsize
    return pl.pallas_call(
        _matmul_acc_kernel,
        out_shape=jax.ShapeDtypeStruct((R, Cout), o_heads.dtype),
        grid=grid,
        in_specs=[
            pl.BlockSpec((None, tm, hd), lambda i, j, h: (h, i, 0)),
            pl.BlockSpec((None, hd, tn), lambda i, j, h: (h, 0, j)),
            pl.BlockSpec((1, tn), lambda i, j, h: (0, j)),
        ],
        out_specs=pl.BlockSpec((tm, tn), lambda i, j, h: (i, j)),
        scratch_shapes=[pltpu.VMEM((tm, tn), jnp.float32)],
        compiler_params=pltpu.CompilerParams(
            dimension_semantics=("parallel", "parallel", "arbitrary")),
        cost_estimate=pl.CostEstimate(
            flops=2 * R * H * hd * Cout,
            transcendentals=0,
            bytes_accessed=(H * R * hd + H * hd * Cout + Cout + R * Cout) * itemsize),
    )(o_heads, w_heads, b2d)


def pallas_attention_core(qh, kh, vh, *, tq_pref=256, tk_pref=512):
    """qh: (H, B, N, hd), kh/vh: (H, B, M, hd) -> (H, B, N, hd)."""
    H, B, N, hd = qh.shape
    M = kh.shape[2]
    tq = _pick_sub_tile(N, tq_pref)
    tk = _pick_sub_tile(M, tk_pref)
    grid = (B, H, N // tq, M // tk)
    itemsize = qh.dtype.itemsize
    return pl.pallas_call(
        _mha_flash_kernel,
        out_shape=jax.ShapeDtypeStruct((H, B, N, hd), qh.dtype),
        grid=grid,
        in_specs=[
            pl.BlockSpec((None, None, tq, hd), lambda b, h, qi, ki: (h, b, qi, 0)),
            pl.BlockSpec((None, None, tk, hd), lambda b, h, qi, ki: (h, b, ki, 0)),
            pl.BlockSpec((None, None, tk, hd), lambda b, h, qi, ki: (h, b, ki, 0)),
        ],
        out_specs=pl.BlockSpec((None, None, tq, hd),
                               lambda b, h, qi, ki: (h, b, qi, 0)),
        scratch_shapes=[
            pltpu.VMEM((tq, 1), jnp.float32),   # running max
            pltpu.VMEM((tq, 1), jnp.float32),   # running sum
            pltpu.VMEM((tq, hd), jnp.float32),  # output accumulator
        ],
        compiler_params=pltpu.CompilerParams(
            dimension_semantics=("parallel", "parallel", "parallel", "arbitrary")),
        cost_estimate=pl.CostEstimate(
            flops=4 * B * H * N * M * hd,
            transcendentals=B * H * N * M,
            bytes_accessed=(2 * B * H * N * hd + 2 * B * H * M * hd) * itemsize),
    )(qh, kh, vh)


class AttentionPallas:
    """Pallas port of denseclip.Attention (eval mode: dropouts are identity)."""

    def __init__(self, dim, num_heads=8, qkv_bias=False, qk_scale=None, key=None):
        self.dim = dim
        self.num_heads = num_heads
        hd = dim // num_heads
        self.head_dim = hd
        self.scale = qk_scale or hd ** (-0.5)
        self.qkv_bias = qkv_bias

        key = key if key is not None else jax.random.PRNGKey(0)
        ks = jax.random.split(key, 5)
        std = 0.02
        # Raw weights stored transposed to (in, out) for x @ W (reference path).
        self.wq = std * jax.random.normal(ks[0], (dim, dim), jnp.float32)
        self.wk = std * jax.random.normal(ks[1], (dim, dim), jnp.float32)
        self.wv = std * jax.random.normal(ks[2], (dim, dim), jnp.float32)
        self.wo = std * jax.random.normal(ks[3], (dim, dim), jnp.float32)
        # qkv_bias=False -> zero biases (identical semantics to no bias).
        self.bq = jnp.zeros((dim,), jnp.float32)
        self.bk = jnp.zeros((dim,), jnp.float32)
        self.bv = jnp.zeros((dim,), jnp.float32)
        self.bo = std * jax.random.normal(ks[4], (dim,), jnp.float32)

        # Pre-arranged head-major parameters for the Pallas kernels (done once).
        H = num_heads

        def split_w(w):
            return w.reshape(dim, H, hd).transpose(1, 0, 2)      # (H, Cin, hd)

        def split_b(b):
            return b.reshape(H, 1, hd)                            # (H, 1, hd)

        # Fold the softmax scale into the q projection (weights + bias).
        self.wq_h = split_w(self.wq) * self.scale
        self.bq_h = split_b(self.bq) * self.scale
        self.wk_h = split_w(self.wk)
        self.bk_h = split_b(self.bk)
        self.wv_h = split_w(self.wv)
        self.bv_h = split_b(self.bv)
        self.wo_h = self.wo.reshape(H, hd, dim)                   # (H, hd, Cout)
        self.bo_2d = self.bo.reshape(1, dim)
        # TODO(synk): attn_drop / proj_drop with p>0 (training mode) not implemented;
        # defaults are p=0.0 so eval-mode semantics are exact.

    def __call__(self, q, k, v):
        B, N, C = q.shape
        assert k.shape == v.shape
        _, M, _ = k.shape
        H, hd = self.num_heads, self.head_dim

        # Projections write head-major (H, rows, hd) directly — no transposes.
        # NOTE: q/k/v are distinct inputs (cross-attention signature), so the
        # three projections cannot be fused into one matmul over shared x.
        qh = pallas_head_projection(q.reshape(B * N, C), self.wq_h, self.bq_h)
        kh = pallas_head_projection(k.reshape(B * M, C), self.wk_h, self.bk_h)
        vh = pallas_head_projection(v.reshape(B * M, C), self.wv_h, self.bv_h)

        qh = qh.reshape(H, B, N, hd)
        kh = kh.reshape(H, B, M, hd)
        vh = vh.reshape(H, B, M, hd)

        # Flash-style attention per (batch, head, q-tile), online softmax over kv.
        oh = pallas_attention_core(qh, kh, vh)                    # (H, B, N, hd)

        # Output projection reduces over heads inside the kernel -> (B*N, C).
        out = pallas_out_projection(oh.reshape(H, B * N, hd), self.wo_h, self.bo_2d)
        return out.reshape(B, N, C)


# ----------------------------------------------------------------------------
# Pure-JAX reference for sanity check
# ----------------------------------------------------------------------------
def reference_forward(mod, q, k, v):
    B, N, C = q.shape
    _, M, _ = k.shape
    H = mod.num_heads
    hd = C // H
    qp = (q.reshape(B * N, C) @ mod.wq + mod.bq).reshape(B, N, H, hd)
    kp = (k.reshape(B * M, C) @ mod.wk + mod.bk).reshape(B, M, H, hd)
    vp = (v.reshape(B * M, C) @ mod.wv + mod.bv).reshape(B, M, H, hd)
    attn = jnp.einsum('bnkc,bmkc->bknm', qp, kp) * mod.scale
    attn = jax.nn.softmax(attn, axis=-1)
    x = jnp.einsum('bknm,bmkc->bnkc', attn, vp).reshape(B, N, C)
    x = x @ mod.wo + mod.bo
    return x


if __name__ == "__main__":
    B, N, M, C, H = 2, 8, 16, 32, 8

    key = jax.random.PRNGKey(0)
    kq, kk, kv, kparams = jax.random.split(key, 4)
    q = jax.random.normal(kq, (B, N, C), jnp.float32)
    k = jax.random.normal(kk, (B, M, C), jnp.float32)
    v = jax.random.normal(kv, (B, M, C), jnp.float32)

    attn = AttentionPallas(dim=C, num_heads=H, key=kparams)

    out = attn(q, k, v)
    out = jax.block_until_ready(out)

    ref = reference_forward(attn, q, k, v)
    assert out.shape == (B, N, C)
    err = float(jnp.max(jnp.abs(out - ref)))
    # Tolerance slightly relaxed vs exact f32 because of the approximate (EUP)
    # reciprocal used for the softmax normalization.
    assert jnp.allclose(out, ref, atol=1e-3, rtol=1e-3), err

    print("KERNEL_OK")
</pallas_src>

<mosaic_0001>
module attributes {stable_mosaic.version = 11 : i64} {
  func.func @_matmul_acc_kernel(%arg0: i32, %arg1: i32, %arg2: i32, %arg3: memref<16x32xf32, #tpu.memory_space<vmem>>, %arg4: memref<1x32x4xf32, #tpu.memory_space<vmem>>, %arg5: memref<1x1x4xf32, #tpu.memory_space<vmem>>, %arg6: memref<1x16x4xf32, #tpu.memory_space<vmem>>, %arg7: memref<16x4xf32, #tpu.memory_space<vmem>>) attributes {dimension_semantics = [#tpu.dimension_semantics<parallel>, #tpu.dimension_semantics<parallel>, #tpu.dimension_semantics<arbitrary>], iteration_bounds = array<i64: 1, 8, 1>, scalar_prefetch = 0 : i64, scratch_operands = 1 : i64, tpu.core_type = #tpu.core_type<tc>, window_params = [{transform_indices = @transform_0, window_bounds = array<i64: 16, 32>}, {transform_indices = @transform_1, window_bounds = array<i64: 1, 32, 4>}, {transform_indices = @transform_2, window_bounds = array<i64: 1, 1, 4>}, {transform_indices = @transform_3, window_bounds = array<i64: 1, 16, 4>}]} {
    %c0_i32 = arith.constant 0 : i32
    %0 = arith.cmpi eq, %arg2, %c0_i32 : i32
    %1 = arith.extui %0 : i1 to i32
    %c0_i32_0 = arith.constant 0 : i32
    %2 = arith.cmpi ne, %1, %c0_i32_0 : i32
    scf.if %2 {
      %cst_11 = arith.constant 0.000000e+00 : f32
      %13 = vector.broadcast %cst_11 : f32 to vector<16x4xf32>
      %c0_12 = arith.constant 0 : index
      %c0_13 = arith.constant 0 : index
      %14 = vector.load %arg7[%c0_12, %c0_13] : memref<16x4xf32, #tpu.memory_space<vmem>>, vector<16x4xf32>
      tpu.vector_store %arg7[%c0_12, %c0_13], %13 {strides = array<i32>} : memref<16x4xf32, #tpu.memory_space<vmem>>, vector<16x4xf32>,
    } else {
    }
    %c0 = arith.constant 0 : index
    %c0_1 = arith.constant 0 : index
    %3 = vector.load %arg7[%c0, %c0_1] : memref<16x4xf32, #tpu.memory_space<vmem>>, vector<16x4xf32>
    %c0_2 = arith.constant 0 : index
    %c0_3 = arith.constant 0 : index
    %4 = vector.load %arg3[%c0_2, %c0_3] : memref<16x32xf32, #tpu.memory_space<vmem>>, vector<16x32xf32>
    %c0_4 = arith.constant 0 : index
    %c0_5 = arith.constant 0 : index
    %c0_6 = arith.constant 0 : index
    %5 = vector.load %arg4[%c0_4, %c0_5, %c0_6] : memref<1x32x4xf32, #tpu.memory_space<vmem>>, vector<1x32x4xf32>
    %6 = vector.shape_cast %5 : vector<1x32x4xf32> to vector<32x4xf32>
    %cst = arith.constant dense<0.000000e+00> : vector<16x4xf32>
    %7 = tpu.matmul %4, %6, %cst {dimension_numbers = #tpu.dot_dimension_numbers<[1], [0], [0], [1], [0, 0, 1, 1], [], []>} : vector<16x32xf32>, vector<32x4xf32>, vector<16x4xf32> -> vector<16x4xf32>
    %8 = arith.addf %3, %7 : vector<16x4xf32>
    %c0_7 = arith.constant 0 : index
    %c0_8 = arith.constant 0 : index
    %9 = vector.load %arg7[%c0_7, %c0_8] : memref<16x4xf32, #tpu.memory_space<vmem>>, vector<16x4xf32>
    tpu.vector_store %arg7[%c0_7, %c0_8], %8 {strides = array<i32>} : memref<16x4xf32, #tpu.memory_space<vmem>>, vector<16x4xf32>,
    %c0_i32_9 = arith.constant 0 : i32
    %10 = arith.cmpi eq, %arg2, %c0_i32_9 : i32
    %11 = arith.extui %10 : i1 to i32
    %c0_i32_10 = arith.constant 0 : i32
    %12 = arith.cmpi ne, %11, %c0_i32_10 : i32
    scf.if %12 {
      %c0_11 = arith.constant 0 : index
      %c0_12 = arith.constant 0 : index
      %13 = vector.load %arg7[%c0_11, %c0_12] : memref<16x4xf32, #tpu.memory_space<vmem>>, vector<16x4xf32>
      %c0_13 = arith.constant 0 : index
      %c0_14 = arith.constant 0 : index
      %c0_15 = arith.constant 0 : index
      %14 = vector.load %arg5[%c0_13, %c0_14, %c0_15] : memref<1x1x4xf32, #tpu.memory_space<vmem>>, vector<1x1x4xf32>
      %15 = vector.shape_cast %14 : vector<1x1x4xf32> to vector<1x4xf32>
      %16 = vector.broadcast %15 : vector<1x4xf32> to vector<16x4xf32>
      %17 = arith.addf %13, %16 : vector<16x4xf32>
      %c0_16 = arith.constant 0 : index
      %c0_17 = arith.constant 0 : index
      %c0_18 = arith.constant 0 : index
      %18 = vector.load %arg6[%c0_16, %c0_17, %c0_18] : memref<1x16x4xf32, #tpu.memory_space<vmem>>, vector<1x16x4xf32>
      %19 = vector.shape_cast %18 : vector<1x16x4xf32> to vector<16x4xf32>
      %20 = vector.shape_cast %17 : vector<16x4xf32> to vector<1x16x4xf32>
      tpu.vector_store %arg6[%c0_16, %c0_17, %c0_18], %20 {strides = array<i32>} : memref<1x16x4xf32, #tpu.memory_space<vmem>>, vector<1x16x4xf32>,
    } else {
    }
    return
  }
  func.func @transform_0(%arg0: i32, %arg1: i32, %arg2: i32) -> (i32, i32) {
    %c0_i32 = arith.constant 0 : i32
    return %arg0, %arg2 : i32, i32
  }
  func.func @transform_1(%arg0: i32, %arg1: i32, %arg2: i32) -> (i32, i32, i32) {
    %c0_i32 = arith.constant 0 : i32
    %c0_i32_0 = arith.constant 0 : i32
    return %arg1, %arg2, %c0_i32 : i32, i32, i32
  }
  func.func @transform_2(%arg0: i32, %arg1: i32, %arg2: i32) -> (i32, i32, i32) {
    %c0_i32 = arith.constant 0 : i32
    %c0_i32_0 = arith.constant 0 : i32
    %c0_i32_1 = arith.constant 0 : i32
    return %arg1, %c0_i32, %c0_i32_0 : i32, i32, i32
  }
  func.func @transform_3(%arg0: i32, %arg1: i32, %arg2: i32) -> (i32, i32, i32) {
    %c0_i32 = arith.constant 0 : i32
    %c0_i32_0 = arith.constant 0 : i32
    return %arg1, %arg0, %c0_i32 : i32, i32, i32
  }
}

</mosaic_0001>

<llo_original>
// kernel: tpu_custom_call.1
$region0: #{tpu_custom_call.1}
  #allocation0 [shape = 'u32[]', space=smem, size = 0x4, offset = 0x4, fixed_abs, tag = 'smem constant byte address 0x4 - core index']
  #allocation1 [shape = 'u32[72,128]{1,0:T(1,128)}', space=vmem, size = 0x9000, scoped, tag = 'internal scratch']
  #allocation2 [shape = 'f32[16,4]{1,0:T(8,128)}', space=vmem, size = 0x2000, scoped, tag = 'scratch operand']
  %s0 = inlined_call_operand.vmem [shape: f32[16,32], index: 0, kind: input, shape index: {}]
  %s1 = inlined_call_operand.vmem [shape: f32[8,32,4], index: 1, kind: input, shape index: {}]
  %s2 = inlined_call_operand.vmem [shape: f32[8,1,4], index: 2, kind: input, shape index: {}]
  %s3 = inlined_call_operand.vmem [shape: f32[8,16,4], index: 3, kind: output, shape index: {}]
  %s4 = sld [smem:[#allocation0]]
  $region53: #{tpu_custom_call.1} parent=0
    _
  %s6 = ssub.s32 1, %s4
  %s7 = scalar_select 0, %s6, %s4
  loop: start=0, step=1, limit=10
  $region2: #{tpu_custom_call.1} parent=0 // loop_pre_header
    _
  $region3: #{tpu_custom_call.1} parent=0 // loop_header
    %s9 = sphi 0, %s13
    %p10 = scmp.ge.s32.totalorder %s9, 10
    %s16 = sphi 0, %s35
    %s17 = sphi 0, %s31
    %s18 = sphi 0, %s27
    %s19 = sphi 0, %s16
    %s20 = sphi 0, %s17
    %s21 = sphi 0, %s18
    %s22 = sphi 0, %s19
    %s23 = sphi 0, %s20
    %s24 = sphi 0, %s21
    %s40 = sphi 0, %s42
    %s43 = sphi 0, %s40
    %s44 = sphi 0, %s43
    %s60 = sphi 0, %s44
    %s68 = sphi 0, %s70
    %s71 = sphi 0, %s68
    %s72 = sphi 0, %s71
    %s88 = sphi 0, %s72
    %s94 = sphi 0, %s96
    %s97 = sphi 0, %s94
    %s98 = sphi 0, %s97
    %s114 = sphi 0, %s98
    %s122 = sphi 0, %s124
    %s125 = sphi 0, %s122
    %s126 = sphi 0, %s125
    %s142 = sphi 0, %s126
  $region4: #{tpu_custom_call.1} parent=0 // loop_header_branch
    %12 = sbr.rel (%p10) target = $region8
  $region5: #{tpu_custom_call.1} parent=0 // loop_body
    %s14 = ssub.s32 %s9, 1
    %s15 = ssub.s32 %s9, 2
    %s25 = sadd.s32 1, %s18
    %p26 = scmp.ge.s32.totalorder %s25, 1
    %s27 = scalar_select %p26, 0, %s25
    %s28 = sadd.s32 1, %s17
    %s29 = scalar_select %p26, %s28, %s17
    %p30 = scmp.ge.s32.totalorder %s29, 8
    %s31 = scalar_select %p30, 0, %s29
    %s32 = sadd.s32 1, %s16
    %s33 = scalar_select %p30, %s32, %s16
    %p34 = scmp.ge.s32.totalorder %s33, 1
    %s35 = scalar_select %p34, 0, %s33
    %s36 = ssub.s32 %s16, %s35
    %s37 = ssub.s32 %s18, %s27
    %s38 = sor.u32 %s36, %s37
    %p39 = scmp.eq.s32.totalorder %s38, 0
    %s41 = sadd.s32 %s40, 1
    %s42 = scalar_select %p39, %s40, %s41
    %p45 = pneg %p39
    %p46 = scmp.eq.s32.totalorder %s9, 7
    %p47 = por %p45, %p46
    %p48 = scmp.ne.s32.totalorder %s40, %s43
    %p49 = scmp.eq.s32.totalorder %s9, 0
    %p50 = por %p48, %p49
    %p51 = scmp.ne.s32.totalorder %s40, %s43
    %p52 = scmp.eq.s32.totalorder %s14, 7
    %p53 = por %p51, %p52
    %p54 = scmp.ne.s32.totalorder %s43, %s44
    %p55 = scmp.eq.s32.totalorder %s14, 0
    %p56 = por %p54, %p55
    %p57 = scmp.ne.s32.totalorder %s43, %s44
    %p58 = scmp.eq.s32.totalorder %s15, 7
    %p59 = por %p57, %p58
    %p61 = scmp.ne.s32.totalorder %s44, %s60
    %p62 = scmp.eq.s32.totalorder %s15, 0
    %p63 = por %p61, %p62
    %s64 = ssub.s32 %s17, %s31
    %s65 = ssub.s32 %s18, %s27
    %s66 = sor.u32 %s64, %s65
    %p67 = scmp.eq.s32.totalorder %s66, 0
    %s69 = sadd.s32 %s68, 1
    %s70 = scalar_select %p67, %s68, %s69
    %p73 = pneg %p67
    %p74 = scmp.eq.s32.totalorder %s9, 7
    %p75 = por %p73, %p74
    %p76 = scmp.ne.s32.totalorder %s68, %s71
    %p77 = scmp.eq.s32.totalorder %s9, 0
    %p78 = por %p76, %p77
    %p79 = scmp.ne.s32.totalorder %s68, %s71
    %p80 = scmp.eq.s32.totalorder %s14, 7
    %p81 = por %p79, %p80
    %p82 = scmp.ne.s32.totalorder %s71, %s72
    %p83 = scmp.eq.s32.totalorder %s14, 0
    %p84 = por %p82, %p83
    %p85 = scmp.ne.s32.totalorder %s71, %s72
    %p86 = scmp.eq.s32.totalorder %s15, 7
    %p87 = por %p85, %p86
    %p89 = scmp.ne.s32.totalorder %s72, %s88
    %p90 = scmp.eq.s32.totalorder %s15, 0
    %p91 = por %p89, %p90
    %s92 = ssub.s32 %s17, %s31
    %p93 = scmp.eq.s32.totalorder %s92, 0
    %s95 = sadd.s32 %s94, 1
    %s96 = scalar_select %p93, %s94, %s95
    %p99 = pneg %p93
    %p100 = scmp.eq.s32.totalorder %s9, 7
    %p101 = por %p99, %p100
    %p102 = scmp.ne.s32.totalorder %s94, %s97
    %p103 = scmp.eq.s32.totalorder %s9, 0
    %p104 = por %p102, %p103
    %p105 = scmp.ne.s32.totalorder %s94, %s97
    %p106 = scmp.eq.s32.totalorder %s14, 7
    %p107 = por %p105, %p106
    %p108 = scmp.ne.s32.totalorder %s97, %s98
    %p109 = scmp.eq.s32.totalorder %s14, 0
    %p110 = por %p108, %p109
    %p111 = scmp.ne.s32.totalorder %s97, %s98
    %p112 = scmp.eq.s32.totalorder %s15, 7
    %p113 = por %p111, %p112
    %p115 = scmp.ne.s32.totalorder %s98, %s114
    %p116 = scmp.eq.s32.totalorder %s15, 0
    %p117 = por %p115, %p116
    %s118 = ssub.s32 %s17, %s31
    %s119 = ssub.s32 %s16, %s35
    %s120 = sor.u32 %s118, %s119
    %p121 = scmp.eq.s32.totalorder %s120, 0
    %s123 = sadd.s32 %s122, 1
    %s124 = scalar_select %p121, %s122, %s123
    %p127 = pneg %p121
    %p128 = scmp.eq.s32.totalorder %s9, 7
    %p129 = por %p127, %p128
    %p130 = scmp.ne.s32.totalorder %s122, %s125
    %p131 = scmp.eq.s32.totalorder %s9, 0
    %p132 = por %p130, %p131
    %p133 = scmp.ne.s32.totalorder %s122, %s125
    %p134 = scmp.eq.s32.totalorder %s14, 7
    %p135 = por %p133, %p134
    %p136 = scmp.ne.s32.totalorder %s125, %s126
    %p137 = scmp.eq.s32.totalorder %s14, 0
    %p138 = por %p136, %p137
    %p139 = scmp.ne.s32.totalorder %s125, %s126
    %p140 = scmp.eq.s32.totalorder %s15, 7
    %p141 = por %p139, %p140
    %p143 = scmp.ne.s32.totalorder %s126, %s142
    %p144 = scmp.eq.s32.totalorder %s15, 0
    %p145 = por %p143, %p144
    %p146 = scmp.le.s32.totalorder 1, %s9
    %p147 = scmp.lt.s32.totalorder %s9, 9
    %p148 = pnand %p146, %p147
    %p149 = pneg %p148
    // Predicated region
    $region9: #{tpu_custom_call.1} parent=5 // pred_check
      _
    $region10: #{tpu_custom_call.1} parent=5 // pred_check_branch
      %151 = sbr.rel (%p148) target = $region12
    $region11: #{tpu_custom_call.1} parent=5 // pred_region
      %s152 = ssub.s32 %s9, 1
      // Predicated region
      $region13: #{tpu_custom_call.1} parent=11 // pred_check
        %p153 = pneg %p56
      $region14: #{tpu_custom_call.1} parent=11 // pred_check_branch
        %155 = sbr.rel (%p153) target = $region16
      $region15: #{tpu_custom_call.1} parent=11 // pred_region
        %s156 = smul.u32 2, %s19
        %p157 = scmp.lt.s32.totalorder %s156, 1
        %s158 = scalar_select %p157, %s156, 1
        %p159 = scmp.lt.s32.totalorder %s21, 0
        %s160 = scalar_select %p159, %s21, 0
        %s161 = sadd.s32 %s160, %s158
        %s162 = smul.addr %s161, 8
        %s163 = scalar_lea.vmem %s0, %s162
        %s164 = smul.u32 2, %s19
      $region16: #{tpu_custom_call.1} parent=11 // pred_fallthru
        _
    $region12: #{tpu_custom_call.1} parent=5 // pred_fallthru
      _
    %p165 = scmp.lt.s32.totalorder %s9, 8
    // Predicated region
    $region17: #{tpu_custom_call.1} parent=5 // pred_check
      %p166 = pneg %p165
    $region18: #{tpu_custom_call.1} parent=5 // pred_check_branch
      %168 = sbr.rel (%p166) target = $region20
    $region19: #{tpu_custom_call.1} parent=5 // pred_region
      // Predicated region
      $region21: #{tpu_custom_call.1} parent=19 // pred_check
        %p169 = pneg %p78
      $region22: #{tpu_custom_call.1} parent=19 // pred_check_branch
        %171 = sbr.rel (%p169) target = $region24
      $region23: #{tpu_custom_call.1} parent=19 // pred_region
        %s172 = smul.u32 4, %s18
        %p173 = scmp.lt.s32.totalorder %s17, 7
        %s174 = scalar_select %p173, %s17, 7
        %p175 = scmp.lt.s32.totalorder %s172, 3
        %s176 = scalar_select %p175, %s172, 3
        %s177 = smul.addr %s174, 4
        %s178 = sadd.s32 %s176, %s177
        %s179 = smul.addr %s178, 8
        %s180 = scalar_lea.vmem %s1, %s179
        %s181 = smul.u32 4, %s18
      $region24: #{tpu_custom_call.1} parent=19 // pred_fallthru
        _
      // Predicated region
      $region25: #{tpu_custom_call.1} parent=19 // pred_check
        %p182 = pneg %p104
      $region26: #{tpu_custom_call.1} parent=19 // pred_check_branch
        %184 = sbr.rel (%p182) target = $region28
      $region27: #{tpu_custom_call.1} parent=19 // pred_region
        %p185 = scmp.lt.s32.totalorder %s17, 7
        %s186 = scalar_select %p185, %s17, 7
        %s187 = scalar_lea.vmem %s2, %s186
      $region28: #{tpu_custom_call.1} parent=19 // pred_fallthru
        _
    $region20: #{tpu_custom_call.1} parent=5 // pred_fallthru
      _
    %p188 = scmp.le.s32.totalorder 1, %s9
    %p189 = scmp.lt.s32.totalorder %s9, 9
    %p190 = pnand %p188, %p189
    %p191 = pneg %p190
    // Predicated region
    $region29: #{tpu_custom_call.1} parent=5 // pred_check
      _
    $region30: #{tpu_custom_call.1} parent=5 // pred_check_branch
      %193 = sbr.rel (%p190) target = $region32
    $region31: #{tpu_custom_call.1} parent=5 // pred_region
      %s194 = ssub.s32 %s9, 1
      %s195 = smul.u32 2, %s19
      %p196 = scmp.lt.s32.totalorder %s195, 1
      %s197 = scalar_select %p196, %s195, 1
      %p198 = scmp.lt.s32.totalorder %s21, 0
      %s199 = scalar_select %p198, %s21, 0
      %s200 = sadd.s32 %s199, %s197
      %s201 = smul.addr %s200, 8
      %s202 = scalar_lea.vmem %s0, %s201
      %p203 = pneg %p56
      %p204 = pneg %p53
      %s205 = smul.u32 4, %s21
      %p206 = scmp.lt.s32.totalorder %s20, 7
      %s207 = scalar_select %p206, %s20, 7
      %p208 = scmp.lt.s32.totalorder %s205, 3
      %s209 = scalar_select %p208, %s205, 3
      %s210 = smul.addr %s207, 4
      %s211 = sadd.s32 %s209, %s210
      %s212 = smul.addr %s211, 8
      %s213 = scalar_lea.vmem %s1, %s212
      %p214 = pneg %p84
      %p215 = pneg %p81
      %p216 = scmp.lt.s32.totalorder %s20, 7
      %s217 = scalar_select %p216, %s20, 7
      %s218 = scalar_lea.vmem %s2, %s217
      %p219 = pneg %p110
      %p220 = pneg %p107
      %p221 = pneg %p138
      %p222 = pneg %p135
      %s223 = smul.u32 2, %s19
      %p224 = scmp.lt.s32.totalorder %s20, 7
      %s225 = scalar_select %p224, %s20, 7
      %p226 = scmp.lt.s32.totalorder %s223, 1
      %s227 = scalar_select %p226, %s223, 1
      %s228 = smul.addr %s225, 2
      %s229 = sadd.s32 %s227, %s228
      %s230 = smul.addr %s229, 8
      %s231 = scalar_lea.vmem %s3, %s230
      %s232 = smul.u32 2, %s19
      %p233 = scmp.lt.s32.totalorder %s232, 1
      %s234 = scalar_select %p233, %s232, 1
      %p235 = scmp.lt.s32.totalorder %s21, 0
      %s236 = scalar_select %p235, %s21, 0
      %s237 = sadd.s32 %s236, %s234
      %s238 = smul.addr %s237, 8
      %s239 = scalar_lea.vmem %s0, %s238
      %s240 = smul.u32 2, %s19
      %s241 = smul.u32 4, %s21
      %p242 = scmp.lt.s32.totalorder %s20, 7
      %s243 = scalar_select %p242, %s20, 7
      %p244 = scmp.lt.s32.totalorder %s241, 3
      %s245 = scalar_select %p244, %s241, 3
      %s246 = smul.addr %s243, 4
      %s247 = sadd.s32 %s245, %s246
      %s248 = smul.addr %s247, 8
      %s249 = scalar_lea.vmem %s1, %s248
      %s250 = smul.u32 4, %s21
      %p251 = scmp.lt.s32.totalorder %s20, 7
      %s252 = scalar_select %p251, %s20, 7
      %s253 = scalar_lea.vmem %s2, %s252
      %s254 = smul.u32 2, %s19
      %p255 = scmp.lt.s32.totalorder %s20, 7
      %s256 = scalar_select %p255, %s20, 7
      %p257 = scmp.lt.s32.totalorder %s254, 1
      %s258 = scalar_select %p257, %s254, 1
      %s259 = smul.addr %s256, 2
      %s260 = sadd.s32 %s258, %s259
      %s261 = smul.addr %s260, 8
      %s262 = scalar_lea.vmem %s3, %s261
      %s263 = smul.u32 2, %s19
      %p264 = scmp.eq.s32.totalorder %s21, 0
      // Predicated region
      $region33: #{tpu_custom_call.1} parent=31 // pred_check
        %p265 = pneg %p264
      $region34: #{tpu_custom_call.1} parent=31 // pred_check_branch
        %267 = sbr.rel (%p265) target = $region36
      $region35: #{tpu_custom_call.1} parent=31 // pred_region
        %vm268 = vcmask 31744
        %269 = vst.msk [vmem:[#allocation2] sm:$0xff] %vm268, 0.0
        %270 = vst.msk [vmem:[#allocation2 + $0x8] sm:$0xff] %vm268, 0.0
      $region36: #{tpu_custom_call.1} parent=31 // pred_fallthru
        _
      %v271 = vld [vmem:[#allocation2] sm:$0xff]
      %v272 = vld [vmem:[#allocation2 + $0x8] sm:$0xff]
      %v273 = vld [vmem:[%s239] sm:$0xff]
      %v274 = vld [vmem:[%s239 + $0x8] sm:$0xff]
      %v275 = vld [vmem:[%s249] sm:$0xff]
      %v276 = vld [vmem:[%s249 + $0x8] sm:$0xff]
      %v277 = vld [vmem:[%s249 + $0x10] sm:$0xff]
      %v278 = vld [vmem:[%s249 + $0x18] sm:$0xff]
      %vm279 = vcmask 261120
      %v281 = vsel %vm279, %v273, 0
      %v284 = vsel %vm279, %v274, 0
      %286 = vmatpush.msra.mxu0 0.0
      %287 = vmatpush.msra.mxu0 0.0
      %288 = vmatpush.msra.mxu0 0.0
      %289 = vmatpush.msra.mxu0 0.0
      %290 = vmatpush.msra.mxu0 0.0
      %291 = vmatpush.msra.mxu0 0.0
      %292 = vmatpush.msra.mxu0 0.0
      %293 = vmatpush.msra.mxu0 0.0
      %294 = vmatpush.msra.mxu0 0.0
      %295 = vmatpush.msra.mxu0 0.0
      %296 = vmatpush.msra.mxu0 0.0
      %297 = vmatpush.msra.mxu0 0.0
      %298 = vmatpush.msra.mxu0 %v278
      %299 = vmatpush.msra.mxu0 %v277
      %300 = vmatpush.msra.mxu0 %v276
      %301 = vmatpush.msra.mxu0 %v275
      %302 = vmatmul.f32.gmra.mxu0 %v281
      %v303 = vpop.f32.mrf.mxu0
      %v304 = vadd.f32 0.0, %v303
      %305 = vmatmul.f32.gmra.mxu0 %v284
      %v306 = vpop.f32.mrf.mxu0
      %v307 = vadd.f32 0.0, %v306
      %308 = vdwg.mxu0
      %v309 = vadd.f32 %v271, %v304
      %v310 = vadd.f32 %v272, %v307
      %vm311 = vcmask 31744
      %312 = vst.msk [vmem:[#allocation2] sm:$0xff] %vm311, %v309
      %313 = vst.msk [vmem:[#allocation2 + $0x8] sm:$0xff] %vm311, %v310
      // Predicated region
      $region37: #{tpu_custom_call.1} parent=31 // pred_check
        %p314 = pneg %p264
      $region38: #{tpu_custom_call.1} parent=31 // pred_check_branch
        %316 = sbr.rel (%p314) target = $region40
      $region39: #{tpu_custom_call.1} parent=31 // pred_region
        %v317 = vld [vmem:[#allocation2] sm:$0xff]
        %v318 = vld [vmem:[#allocation2 + $0x8] sm:$0xff]
        %v319 = vld [vmem:[%s253] sm:$0x1]
        %v321 = vperm.slane %v319, 0
        %v323 = vadd.f32 %v317, %v321
        %v324 = vadd.f32 %v318, %v321
        %325 = vst.msk [vmem:[%s262] sm:$0xff] %vm311, %v323
        %326 = vst.msk [vmem:[%s262 + $0x8] sm:$0xff] %vm311, %v324
      $region40: #{tpu_custom_call.1} parent=31 // pred_fallthru
        _
      %s327 = smul.u32 2, %s19
      %p328 = scmp.lt.s32.totalorder %s20, 7
      %s329 = scalar_select %p328, %s20, 7
      %p330 = scmp.lt.s32.totalorder %s327, 1
      %s331 = scalar_select %p330, %s327, 1
      %s332 = smul.addr %s329, 2
      %s333 = sadd.s32 %s331, %s332
      %s334 = smul.addr %s333, 8
      %s335 = scalar_lea.vmem %s3, %s334
      // Predicated region
      $region41: #{tpu_custom_call.1} parent=31 // pred_check
        %p336 = pneg %p135
      $region42: #{tpu_custom_call.1} parent=31 // pred_check_branch
        %338 = sbr.rel (%p336) target = $region44
      $region43: #{tpu_custom_call.1} parent=31 // pred_region
        %s339 = smul.u32 2, %s19
      $region44: #{tpu_custom_call.1} parent=31 // pred_fallthru
        _
    $region32: #{tpu_custom_call.1} parent=5 // pred_fallthru
      _
    %p340 = scmp.le.s32.totalorder 2, %s9
    // Predicated region
    $region45: #{tpu_custom_call.1} parent=5 // pred_check
      %p341 = pneg %p340
    $region46: #{tpu_custom_call.1} parent=5 // pred_check_branch
      %343 = sbr.rel (%p341) target = $region48
    $region47: #{tpu_custom_call.1} parent=5 // pred_region
      %s344 = ssub.s32 %s9, 2
      // Predicated region
      $region49: #{tpu_custom_call.1} parent=47 // pred_check
        %p345 = pneg %p141
      $region50: #{tpu_custom_call.1} parent=47 // pred_check_branch
        %347 = sbr.rel (%p345) target = $region52
      $region51: #{tpu_custom_call.1} parent=47 // pred_region
        %s348 = smul.u32 2, %s22
        %p349 = scmp.lt.s32.totalorder %s23, 7
        %s350 = scalar_select %p349, %s23, 7
        %p351 = scmp.lt.s32.totalorder %s348, 1
        %s352 = scalar_select %p351, %s348, 1
        %s353 = smul.addr %s350, 2
        %s354 = sadd.s32 %s352, %s353
        %s355 = smul.addr %s354, 8
        %s356 = scalar_lea.vmem %s3, %s355
      $region52: #{tpu_custom_call.1} parent=47 // pred_fallthru
        _
    $region48: #{tpu_custom_call.1} parent=5 // pred_fallthru
      _
  $region6: #{tpu_custom_call.1} parent=0 // loop_footer
    %s13 = sadd.s32 1, %s9
  $region7: #{tpu_custom_call.1} parent=0 // loop_footer_branch
    %8 = sbr.rel target = $region3
  $region8: #{tpu_custom_call.1} parent=0 // loop_exit
    _

</llo_original>
